<compile_context>
chip_gen: v7x
topology: tpu7x:2x2x1
jax: 0.10.0
libtpu: 0.0.40
codegen_flags: <defaults>
</compile_context>

<pallas_src>
import math

import jax
import jax.numpy as jnp
from jax.experimental import pallas as pl
from jax.experimental.pallas import tpu as pltpu

_LANE = 128
_SUBLANE = 8
_MAX_BLOCK_ROWS = 2048  # 2048*128*4B = 1 MiB per stream per buffer; ~6 MiB total double-buffered


def _mix_kernel(w_ref, a_ref, b_ref, o_ref):
    # w_ref: (1, 1) f32 in VMEM; a_ref/b_ref/o_ref: (block_rows, 128)
    w = w_ref[...]                              # (1, 1)
    m = 1.0 / (1.0 + jnp.exp(-w))               # sigmoid(w), scalar tile on EUP
    a = a_ref[...].astype(jnp.float32)
    b = b_ref[...].astype(jnp.float32)
    # exact forward semantics of Mix: fea1 * m + fea2 * (1 - m)
    o_ref[...] = (a * m + b * (1.0 - m)).astype(o_ref.dtype)


def mix_forward(fea1, fea2, w):
    """out = fea1 * sigmoid(w) + fea2 * (1 - sigmoid(w)), elementwise."""
    assert fea1.shape == fea2.shape, "fea1/fea2 must have identical shapes"
    orig_shape = fea1.shape
    out_dtype = fea1.dtype
    total = math.prod(orig_shape)

    # Lane-dense 2D view: (rows, 128); pad rows to a multiple of the block.
    rows = pl.cdiv(total, _LANE)
    block_rows = min(_MAX_BLOCK_ROWS,
                     ((rows + _SUBLANE - 1) // _SUBLANE) * _SUBLANE)
    grid = pl.cdiv(rows, block_rows)
    padded_rows = grid * block_rows
    pad = padded_rows * _LANE - total

    a2d = jnp.pad(fea1.reshape(-1), (0, pad)).reshape(padded_rows, _LANE)
    b2d = jnp.pad(fea2.reshape(-1), (0, pad)).reshape(padded_rows, _LANE)
    w2d = jnp.asarray(w, dtype=jnp.float32).reshape(1, 1)

    out = pl.pallas_call(
        _mix_kernel,
        out_shape=jax.ShapeDtypeStruct((padded_rows, _LANE), out_dtype),
        grid_spec=pltpu.PrefetchScalarGridSpec(
            num_scalar_prefetch=0,
            grid=(grid,),
            in_specs=[
                pl.BlockSpec((1, 1), lambda i: (0, 0)),                    # scalar w
                pl.BlockSpec((block_rows, _LANE), lambda i: (i, 0)),       # fea1 tile
                pl.BlockSpec((block_rows, _LANE), lambda i: (i, 0)),       # fea2 tile
            ],
            out_specs=pl.BlockSpec((block_rows, _LANE), lambda i: (i, 0)),
        ),
        compiler_params=pltpu.CompilerParams(
            dimension_semantics=("parallel",)),
    )(w2d, a2d, b2d)

    return out.reshape(-1)[:total].reshape(orig_shape)


if __name__ == "__main__":
    key = jax.random.PRNGKey(0)
    k1, k2 = jax.random.split(key, 2)

    N, C, H, W = 2, 4, 16, 16
    fea1 = jax.random.normal(k1, (N, C, H, W), dtype=jnp.float32)
    fea2 = jax.random.normal(k2, (N, C, H, W), dtype=jnp.float32)
    w = jnp.float32(-0.8)  # Mix(m=-0.8) learnable parameter (initial value)

    y = mix_forward(fea1, fea2, w)
    jax.block_until_ready(y)

    # pure-JAX reference check
    m = jax.nn.sigmoid(w)
    ref = fea1 * m + fea2 * (1.0 - m)
    assert y.shape == (N, C, H, W)
    assert jnp.allclose(y, ref, atol=1e-6, rtol=1e-6)
    print("KERNEL_OK")
</pallas_src>

<mosaic_0001>
module attributes {stable_mosaic.version = 11 : i64} {
  func.func @_mix_kernel(%arg0: i32, %arg1: memref<1x1xf32, #tpu.memory_space<vmem>>, %arg2: memref<16x128xf32, #tpu.memory_space<vmem>>, %arg3: memref<16x128xf32, #tpu.memory_space<vmem>>, %arg4: memref<16x128xf32, #tpu.memory_space<vmem>>) attributes {dimension_semantics = [#tpu.dimension_semantics<parallel>], iteration_bounds = array<i64: 1>, scalar_prefetch = 0 : i64, scratch_operands = 0 : i64, tpu.core_type = #tpu.core_type<tc>, window_params = [{pipeline_mode = #tpu.pipeline_mode<synchronous>, transform_indices = @transform_0, window_bounds = array<i64: 1, 1>}, {transform_indices = @transform_1, window_bounds = array<i64: 16, 128>}, {transform_indices = @transform_2, window_bounds = array<i64: 16, 128>}, {transform_indices = @transform_3, window_bounds = array<i64: 16, 128>}]} {
    %c0 = arith.constant 0 : index
    %c0_0 = arith.constant 0 : index
    %0 = vector.load %arg1[%c0, %c0_0] : memref<1x1xf32, #tpu.memory_space<vmem>>, vector<1x1xf32>
    %cst = arith.constant 0.000000e+00 : f32
    %1 = vector.broadcast %cst : f32 to vector<1x1xf32>
    %2 = arith.subf %1, %0 : vector<1x1xf32>
    %3 = math.exp %2 : vector<1x1xf32>
    %cst_1 = arith.constant 1.000000e+00 : f32
    %4 = vector.broadcast %cst_1 : f32 to vector<1x1xf32>
    %5 = arith.addf %4, %3 : vector<1x1xf32>
    %cst_2 = arith.constant 1.000000e+00 : f32
    %6 = vector.broadcast %cst_2 : f32 to vector<1x1xf32>
    %7 = arith.divf %6, %5 : vector<1x1xf32>
    %c0_3 = arith.constant 0 : index
    %c0_4 = arith.constant 0 : index
    %8 = vector.load %arg2[%c0_3, %c0_4] : memref<16x128xf32, #tpu.memory_space<vmem>>, vector<16x128xf32>
    %c0_5 = arith.constant 0 : index
    %c0_6 = arith.constant 0 : index
    %9 = vector.load %arg3[%c0_5, %c0_6] : memref<16x128xf32, #tpu.memory_space<vmem>>, vector<16x128xf32>
    %10 = vector.broadcast %7 : vector<1x1xf32> to vector<16x128xf32>
    %11 = arith.mulf %8, %10 : vector<16x128xf32>
    %cst_7 = arith.constant 1.000000e+00 : f32
    %12 = vector.broadcast %cst_7 : f32 to vector<1x1xf32>
    %13 = arith.subf %12, %7 : vector<1x1xf32>
    %14 = vector.broadcast %13 : vector<1x1xf32> to vector<16x128xf32>
    %15 = arith.mulf %9, %14 : vector<16x128xf32>
    %16 = arith.addf %11, %15 : vector<16x128xf32>
    %c0_8 = arith.constant 0 : index
    %c0_9 = arith.constant 0 : index
    %17 = vector.load %arg4[%c0_8, %c0_9] : memref<16x128xf32, #tpu.memory_space<vmem>>, vector<16x128xf32>
    tpu.vector_store %arg4[%c0_8, %c0_9], %16 {strides = array<i32>} : memref<16x128xf32, #tpu.memory_space<vmem>>, vector<16x128xf32>,
    return
  }
  func.func @transform_0(%arg0: i32) -> (i32, i32) {
    %c0_i32 = arith.constant 0 : i32
    %c0_i32_0 = arith.constant 0 : i32
    %c0_i32_1 = arith.constant 0 : i32
    return %c0_i32, %c0_i32_0 : i32, i32
  }
  func.func @transform_1(%arg0: i32) -> (i32, i32) {
    %c0_i32 = arith.constant 0 : i32
    %c0_i32_0 = arith.constant 0 : i32
    return %arg0, %c0_i32 : i32, i32
  }
  func.func @transform_2(%arg0: i32) -> (i32, i32) {
    %c0_i32 = arith.constant 0 : i32
    %c0_i32_0 = arith.constant 0 : i32
    return %arg0, %c0_i32 : i32, i32
  }
  func.func @transform_3(%arg0: i32) -> (i32, i32) {
    %c0_i32 = arith.constant 0 : i32
    %c0_i32_0 = arith.constant 0 : i32
    return %arg0, %c0_i32 : i32, i32
  }
}

</mosaic_0001>

<llo_original>
// kernel: tpu_custom_call.1
$region0: #{tpu_custom_call.1}
  #allocation0 [shape = 'u32[]', space=smem, size = 0x4, offset = 0x4, fixed_abs, tag = 'smem constant byte address 0x4 - core index']
  #allocation1 [shape = 'u32[144,128]{1,0:T(1,128)}', space=vmem, size = 0x12000, scoped, tag = 'internal scratch']
  #allocation2 [shape = 'f32[1,1]{1,0:T(1,128)S(1)}', space=vmem, size = 0x200, scoped, tag = 'scoped memory for tpu_custom_call.1']
  %s0 = inlined_call_operand.<no memory space> [shape: f32[1,1], index: 0, kind: input, shape index: {}]
  %s1 = inlined_call_operand.hbm [shape: f32[16,128], index: 1, kind: input, shape index: {}]
  %s2 = inlined_call_operand.hbm [shape: f32[16,128], index: 2, kind: input, shape index: {}]
  %s3 = inlined_call_operand.hbm [shape: f32[16,128], index: 3, kind: output, shape index: {}]
  %s4 = sld [smem:[#allocation0]]
  $region30: #{tpu_custom_call.1} parent=0
    _
  %s6 = ssub.s32 1, %s4
  %s7 = scalar_select 0, %s6, %s4
  %v8 = vstv %s0
  %9 = vst [vmem:[#allocation2] sm:$0x1] %v8
  $region1: #{tpu_custom_call.1} parent=0
    #allocation3 [shape = 'u8[8192]{0}', space=vmem, size = 0x2000, scoped, tag = 'input window, operand 1, single buffered']
    #allocation4 [shape = 's32[1]{0}', space=sflag, size = 0x4, scoped, tag = 'scoped memory for tpu_custom_call.1']
    #allocation5 [shape = 's32[1]{0}', space=sflag, size = 0x4, scoped, tag = 'scoped memory for tpu_custom_call.1']
    #allocation6 [shape = 'u8[8192]{0}', space=vmem, size = 0x2000, scoped, tag = 'input window, operand 2, single buffered']
    #allocation7 [shape = 's32[1]{0}', space=sflag, size = 0x4, scoped, tag = 'scoped memory for tpu_custom_call.1']
    #allocation8 [shape = 'u8[8192]{0}', space=vmem, size = 0x2000, scoped, tag = 'output window, operand 0, single buffered']
    %10 = vsyncpa [#allocation4], 0
    %11 = vsyncpa [#allocation7], 0
    %12 = vsyncpa [#allocation5], 0
    // Predicated region
    $region2: #{tpu_custom_call.1} parent=1 // pred_check
      _
    $region3: #{tpu_custom_call.1} parent=1 // pred_check_branch
      %14 = sbr.rel (0) target = $region5
    $region4: #{tpu_custom_call.1} parent=1 // pred_region
      _
    $region5: #{tpu_custom_call.1} parent=1 // pred_fallthru
      _
    // Predicated region
    $region6: #{tpu_custom_call.1} parent=1 // pred_check
      _
    $region7: #{tpu_custom_call.1} parent=1 // pred_check_branch
      %16 = sbr.rel (0) target = $region9
    $region8: #{tpu_custom_call.1} parent=1 // pred_region
      %s18 = ssub.s32 256, 256
      %19 = vsyncadd [#allocation4], %s18
      %s20 = sshll.u32 [#allocation3], 4
      %s21 = int_to_ptr.vmem [resolvable:$true] %s20
      %26 = dma.hbm_to_vmem [thread:$0]  %s1, 256, %s21, [#allocation4], 128, 128, 8
    $region9: #{tpu_custom_call.1} parent=1 // pred_fallthru
      _
    // Predicated region
    $region10: #{tpu_custom_call.1} parent=1 // pred_check
      _
    $region11: #{tpu_custom_call.1} parent=1 // pred_check_branch
      %28 = sbr.rel (0) target = $region13
    $region12: #{tpu_custom_call.1} parent=1 // pred_region
      %s30 = ssub.s32 256, 256
      %31 = vsyncadd [#allocation7], %s30
      %s32 = sshll.u32 [#allocation6], 4
      %s33 = int_to_ptr.vmem [resolvable:$true] %s32
      %38 = dma.hbm_to_vmem [thread:$0]  %s2, 256, %s33, [#allocation7], 128, 128, 8
    $region13: #{tpu_custom_call.1} parent=1 // pred_fallthru
      _
    // Predicated region
    $region14: #{tpu_custom_call.1} parent=1 // pred_check
      _
    $region15: #{tpu_custom_call.1} parent=1 // pred_check_branch
      %40 = sbr.rel (0) target = $region17
    $region16: #{tpu_custom_call.1} parent=1 // pred_region
      %41 = dma.done [#allocation4], 256
    $region17: #{tpu_custom_call.1} parent=1 // pred_fallthru
      _
    // Predicated region
    $region18: #{tpu_custom_call.1} parent=1 // pred_check
      _
    $region19: #{tpu_custom_call.1} parent=1 // pred_check_branch
      %43 = sbr.rel (0) target = $region21
    $region20: #{tpu_custom_call.1} parent=1 // pred_region
      %44 = dma.done [#allocation7], 256
    $region21: #{tpu_custom_call.1} parent=1 // pred_fallthru
      _
    %v45 = vld [vmem:[#allocation2] sm:$0x1]
    %v46 = vsub.f32 0.0, %v45
    %v47 = vmul.f32 %v46, 1.442695
    %v48 = vpow.pop %v47
    %v49 = vadd.f32 %v48, 1.0
    %v50 = vrcp.pop %v49
    %v51 = vmul.f32 1.0, %v50
    %v52 = vld [vmem:[#allocation3] sm:$0xff]
    %v53 = vld [vmem:[#allocation3 + $0x8] sm:$0xff]
    %v54 = vld [vmem:[#allocation6] sm:$0xff]
    %v55 = vld [vmem:[#allocation6 + $0x8] sm:$0xff]
    %v57 = vlaneseq
    %v58 = vshrl.u32 %v57, 7
    %v59 = vsub.s32 0, %v58
    %v60 = vrot.slane %v51, %v59
    %61 = vset.pattern.permute.xlu0 0
    %62 = vperm.xlu0 %61, %v60
    %v63 = vpop.permute.xlu0 %62
    %v65 = vmul.f32 %v52, %v63
    %v66 = vmul.f32 %v53, %v63
    %v67 = vsub.f32 1.0, %v51
    %v69 = vlaneseq
    %v70 = vshrl.u32 %v69, 7
    %v71 = vsub.s32 0, %v70
    %v72 = vrot.slane %v67, %v71
    %73 = vset.pattern.permute.xlu0 0
    %74 = vperm.xlu0 %73, %v72
    %v75 = vpop.permute.xlu0 %74
    %v77 = vmul.f32 %v54, %v75
    %v78 = vmul.f32 %v55, %v75
    %v79 = vadd.f32 %v65, %v77
    %v80 = vadd.f32 %v66, %v78
    %81 = vst [vmem:[#allocation8] sm:$0xff] %v79
    %82 = vst [vmem:[#allocation8 + $0x8] sm:$0xff] %v80
    // Predicated region
    $region22: #{tpu_custom_call.1} parent=1 // pred_check
      _
    $region23: #{tpu_custom_call.1} parent=1 // pred_check_branch
      %84 = sbr.rel (0) target = $region25
    $region24: #{tpu_custom_call.1} parent=1 // pred_region
      %s86 = ssub.s32 256, 256
      %87 = vsyncadd [#allocation5], %s86
      %s88 = sshll.u32 [#allocation8], 4
      %s89 = int_to_ptr.vmem [resolvable:$true] %s88
      %94 = dma.vmem_to_hbm [thread:$0]  %s89, 256, %s3, [#allocation5], 128, 128, 8
    $region25: #{tpu_custom_call.1} parent=1 // pred_fallthru
      _
    // Predicated region
    $region26: #{tpu_custom_call.1} parent=1 // pred_check
      _
    $region27: #{tpu_custom_call.1} parent=1 // pred_check_branch
      %96 = sbr.rel (0) target = $region29
    $region28: #{tpu_custom_call.1} parent=1 // pred_region
      %97 = dma.done [#allocation5], 256
    $region29: #{tpu_custom_call.1} parent=1 // pred_fallthru
      _
    %98 = vsyncpa [#allocation4], 1
    %99 = vsyncpa [#allocation7], 1
    %100 = vsyncpa [#allocation5], 1

</llo_original>
